<compile_context>
chip_gen: v7x
topology: tpu7x:2x2x1
jax: 0.10.0
libtpu: 0.0.40
codegen_flags: <defaults>
</compile_context>

<pallas_src>
import jax
import jax.numpy as jnp
from jax.experimental import pallas as pl
from jax.experimental.pallas import tpu as pltpu


def _make_kernel(tap_offsets, compute_dtype, use_mxu):
    """Builds the kernel body with the static flat-HW tap offsets baked in."""

    def kernel(x_ref, wcomb_ref, wpw_ref, o_ref):
        # x_ref     : (1, Cin, HW)      flat image, HW on the lane axis
        # wcomb_ref : (K*K, Cin, HW)    depthwise weights with the zero-padding
        #                               border mask already folded in (0 off-image)
        # wpw_ref   : (Cout, Cin)       pointwise 1x1 weights
        # o_ref     : (1, Cout, HW)     lane-dense output slab
        cin, hw = x_ref.shape[1], x_ref.shape[2]
        cout = wpw_ref.shape[0]

        x = x_ref[0].astype(compute_dtype)                 # (Cin, HW)

        # ---- depthwise: one lane-roll (XLU) + one fused mul-add (VPU) per tap ----
        acc = jnp.zeros((cin, hw), compute_dtype)
        for t, d in enumerate(tap_offsets):
            if d == 0:
                shifted = x
            else:
                # shifted[p] = x[(p + d) % HW]; wrapped / off-image entries are
                # killed by the zeros pre-folded into wcomb.
                shifted = pltpu.roll(x, (-d) % hw, axis=1)
            acc = acc + shifted * wcomb_ref[t].astype(compute_dtype)

        # ---- pointwise 1x1 ----
        wpw = wpw_ref[...].astype(compute_dtype)           # (Cout, Cin)
        if use_mxu:
            out = jnp.dot(wpw, acc, preferred_element_type=jnp.float32)
        else:
            # Tiny channel counts: broadcast-mul-add on the VPU, skip the MXU.
            out = jnp.zeros((cout, hw), compute_dtype)
            for ci in range(cin):
                out = out + wpw[:, ci:ci + 1] * acc[ci:ci + 1, :]
        o_ref[0] = out.astype(o_ref.dtype)

    return kernel


def separable_conv2d(x_nchw, w_dw, w_pw, padding=1):
    """x_nchw: (N, Cin, H, W)
    w_dw   : (Cin, 1, K, K)    -- PyTorch depthwise Conv2d weight (groups=Cin)
    w_pw   : (Cout, Cin, 1, 1) -- PyTorch pointwise Conv2d weight
    returns: (N, Cout, H, W)   (module uses padding=1, kernel_size=3 -> "same" conv)
    """
    N, Cin, H, W = x_nchw.shape
    K = w_dw.shape[-1]
    Cout = w_pw.shape[0]
    if K != 2 * padding + 1:
        # The flat-HW roll formulation assumes output spatial == input spatial,
        # which is exactly the module's configuration (padding=1, kernel_size=3).
        raise NotImplementedError("kernel assumes a 'same' conv: K == 2*padding + 1")
    HW = H * W

    # Free contiguous reshapes only (no transpose, no pad -> no extra HBM traffic).
    x_flat = x_nchw.reshape(N, Cin, HW)
    wdw = w_dw.reshape(Cin, K * K)
    wpw = w_pw.reshape(Cout, Cin)

    # Flat-HW tap offsets and matching zero-padding border masks (0/1), one per tap.
    hh = jnp.arange(H)[:, None]
    ww = jnp.arange(W)[None, :]
    tap_offsets = []
    masks = []
    for kh in range(K):
        for kw in range(K):
            dh, dw = kh - padding, kw - padding
            tap_offsets.append(dh * W + dw)
            m = (hh + dh >= 0) & (hh + dh < H) & (ww + dw >= 0) & (ww + dw < W)
            masks.append(m.reshape(HW))
    mask = jnp.stack(masks).astype(jnp.float32)            # (K*K, HW)

    # Fold the border mask into the depthwise weights once, outside the kernel and
    # amortized over the batch: w_comb[t, c, p] = wdw[c, t] * mask[t, p].
    w_comb = wdw.T[:, :, None] * mask[:, None, :]           # (K*K, Cin, HW)

    # VPU pointwise for tiny channels, MXU for large channels.
    use_mxu = min(Cin, Cout) >= 128
    # NOTE: compute in f32 everywhere (safe on v5e which has no bf16 VPU); on
    # v6e/v7x a bf16 compute_dtype would also be legal and halves VMEM footprint.
    kernel = _make_kernel(tuple(tap_offsets), jnp.float32, use_mxu)

    out_flat = pl.pallas_call(
        kernel,
        out_shape=jax.ShapeDtypeStruct((N, Cout, HW), x_nchw.dtype),
        grid=(N,),
        in_specs=[
            pl.BlockSpec((1, Cin, HW), lambda n: (n, 0, 0)),
            pl.BlockSpec((K * K, Cin, HW), lambda n: (0, 0, 0)),
            pl.BlockSpec((Cout, Cin), lambda n: (0, 0)),
        ],
        out_specs=pl.BlockSpec((1, Cout, HW), lambda n: (n, 0, 0)),
        compiler_params=pltpu.CompilerParams(
            # Batch axis is independent -> shard across the 2 TensorCores on v7x.
            dimension_semantics=("parallel",),
        ),
    )(x_flat, w_comb, wpw)

    # For large images, add an H-strip grid axis (strip height a multiple of 8 plus
    # K-1 halo rows) and raise vmem_limit_bytes; unnecessary at these sizes.
    return out_flat.reshape(N, Cout, H, W)


def _reference(x_nchw, w_dw, w_pw, padding=1):
    """Pure-JAX reference (XLA convs) matching nn.Conv2d semantics."""
    Cin = x_nchw.shape[1]
    dw = jax.lax.conv_general_dilated(
        x_nchw, w_dw, window_strides=(1, 1),
        padding=((padding, padding), (padding, padding)),
        dimension_numbers=("NCHW", "OIHW", "NCHW"),
        feature_group_count=Cin)
    pw = jax.lax.conv_general_dilated(
        dw, w_pw, window_strides=(1, 1), padding=((0, 0), (0, 0)),
        dimension_numbers=("NCHW", "OIHW", "NCHW"))
    return pw


if __name__ == "__main__":
    key = jax.random.PRNGKey(0)
    k_x, k_dw, k_pw = jax.random.split(key, 3)

    N, Cin, H, W = 2, 4, 16, 16
    Cout, K = 8, 3

    x = jax.random.normal(k_x, (N, Cin, H, W), dtype=jnp.float32)
    # Deterministic synthetic weights (shapes follow nn.Conv2d in __init__, bias=False):
    w_dw = jax.random.normal(k_dw, (Cin, 1, K, K), dtype=jnp.float32) * 0.1
    w_pw = jax.random.normal(k_pw, (Cout, Cin, 1, 1), dtype=jnp.float32) * 0.1

    out = jax.block_until_ready(separable_conv2d(x, w_dw, w_pw))
    ref = jax.block_until_ready(_reference(x, w_dw, w_pw))

    assert out.shape == (N, Cout, H, W), out.shape
    max_err = float(jnp.abs(out - ref).max())
    assert jnp.allclose(out, ref, atol=1e-4, rtol=1e-4), max_err

    print("KERNEL_OK")
</pallas_src>

<mosaic_0001>
module attributes {stable_mosaic.version = 11 : i64} {
  func.func @kernel(%arg0: i32, %arg1: memref<1x4x256xf32, #tpu.memory_space<vmem>>, %arg2: memref<9x4x256xf32, #tpu.memory_space<vmem>>, %arg3: memref<8x4xf32, #tpu.memory_space<vmem>>, %arg4: memref<1x8x256xf32, #tpu.memory_space<vmem>>) attributes {dimension_semantics = [#tpu.dimension_semantics<parallel>], iteration_bounds = array<i64: 2>, scalar_prefetch = 0 : i64, scratch_operands = 0 : i64, tpu.core_type = #tpu.core_type<tc>, window_params = [{transform_indices = @transform_0, window_bounds = array<i64: 1, 4, 256>}, {pipeline_mode = #tpu.pipeline_mode<synchronous>, transform_indices = @transform_1, window_bounds = array<i64: 9, 4, 256>}, {pipeline_mode = #tpu.pipeline_mode<synchronous>, transform_indices = @transform_2, window_bounds = array<i64: 8, 4>}, {transform_indices = @transform_3, window_bounds = array<i64: 1, 8, 256>}]} {
    %c0 = arith.constant 0 : index
    %c0_0 = arith.constant 0 : index
    %c0_1 = arith.constant 0 : index
    %0 = vector.load %arg1[%c0, %c0_0, %c0_1] : memref<1x4x256xf32, #tpu.memory_space<vmem>>, vector<1x4x256xf32>
    %1 = vector.shape_cast %0 : vector<1x4x256xf32> to vector<4x256xf32>
    %cst = arith.constant 0.000000e+00 : f32
    %2 = vector.broadcast %cst : f32 to vector<4x256xf32>
    %c17_i32 = arith.constant 17 : i32
    %3 = tpu.dynamic_rotate %1 by %c17_i32 dim 1 : vector<4x256xf32>, i32 -> vector<4x256xf32>
    %c0_2 = arith.constant 0 : index
    %c0_3 = arith.constant 0 : index
    %c0_4 = arith.constant 0 : index
    %4 = vector.load %arg2[%c0_2, %c0_3, %c0_4] : memref<9x4x256xf32, #tpu.memory_space<vmem>>, vector<1x4x256xf32>
    %5 = vector.shape_cast %4 : vector<1x4x256xf32> to vector<4x256xf32>
    %6 = arith.mulf %3, %5 : vector<4x256xf32>
    %7 = arith.addf %2, %6 : vector<4x256xf32>
    %c16_i32 = arith.constant 16 : i32
    %8 = tpu.dynamic_rotate %1 by %c16_i32 dim 1 : vector<4x256xf32>, i32 -> vector<4x256xf32>
    %c1 = arith.constant 1 : index
    %c0_5 = arith.constant 0 : index
    %c0_6 = arith.constant 0 : index
    %9 = vector.load %arg2[%c1, %c0_5, %c0_6] : memref<9x4x256xf32, #tpu.memory_space<vmem>>, vector<1x4x256xf32>
    %10 = vector.shape_cast %9 : vector<1x4x256xf32> to vector<4x256xf32>
    %11 = arith.mulf %8, %10 : vector<4x256xf32>
    %12 = arith.addf %7, %11 : vector<4x256xf32>
    %c15_i32 = arith.constant 15 : i32
    %13 = tpu.dynamic_rotate %1 by %c15_i32 dim 1 : vector<4x256xf32>, i32 -> vector<4x256xf32>
    %c2 = arith.constant 2 : index
    %c0_7 = arith.constant 0 : index
    %c0_8 = arith.constant 0 : index
    %14 = vector.load %arg2[%c2, %c0_7, %c0_8] : memref<9x4x256xf32, #tpu.memory_space<vmem>>, vector<1x4x256xf32>
    %15 = vector.shape_cast %14 : vector<1x4x256xf32> to vector<4x256xf32>
    %16 = arith.mulf %13, %15 : vector<4x256xf32>
    %17 = arith.addf %12, %16 : vector<4x256xf32>
    %c1_i32 = arith.constant 1 : i32
    %18 = tpu.dynamic_rotate %1 by %c1_i32 dim 1 : vector<4x256xf32>, i32 -> vector<4x256xf32>
    %c3 = arith.constant 3 : index
    %c0_9 = arith.constant 0 : index
    %c0_10 = arith.constant 0 : index
    %19 = vector.load %arg2[%c3, %c0_9, %c0_10] : memref<9x4x256xf32, #tpu.memory_space<vmem>>, vector<1x4x256xf32>
    %20 = vector.shape_cast %19 : vector<1x4x256xf32> to vector<4x256xf32>
    %21 = arith.mulf %18, %20 : vector<4x256xf32>
    %22 = arith.addf %17, %21 : vector<4x256xf32>
    %c4 = arith.constant 4 : index
    %c0_11 = arith.constant 0 : index
    %c0_12 = arith.constant 0 : index
    %23 = vector.load %arg2[%c4, %c0_11, %c0_12] : memref<9x4x256xf32, #tpu.memory_space<vmem>>, vector<1x4x256xf32>
    %24 = vector.shape_cast %23 : vector<1x4x256xf32> to vector<4x256xf32>
    %25 = arith.mulf %1, %24 : vector<4x256xf32>
    %26 = arith.addf %22, %25 : vector<4x256xf32>
    %c255_i32 = arith.constant 255 : i32
    %27 = tpu.dynamic_rotate %1 by %c255_i32 dim 1 : vector<4x256xf32>, i32 -> vector<4x256xf32>
    %c5 = arith.constant 5 : index
    %c0_13 = arith.constant 0 : index
    %c0_14 = arith.constant 0 : index
    %28 = vector.load %arg2[%c5, %c0_13, %c0_14] : memref<9x4x256xf32, #tpu.memory_space<vmem>>, vector<1x4x256xf32>
    %29 = vector.shape_cast %28 : vector<1x4x256xf32> to vector<4x256xf32>
    %30 = arith.mulf %27, %29 : vector<4x256xf32>
    %31 = arith.addf %26, %30 : vector<4x256xf32>
    %c241_i32 = arith.constant 241 : i32
    %32 = tpu.dynamic_rotate %1 by %c241_i32 dim 1 : vector<4x256xf32>, i32 -> vector<4x256xf32>
    %c6 = arith.constant 6 : index
    %c0_15 = arith.constant 0 : index
    %c0_16 = arith.constant 0 : index
    %33 = vector.load %arg2[%c6, %c0_15, %c0_16] : memref<9x4x256xf32, #tpu.memory_space<vmem>>, vector<1x4x256xf32>
    %34 = vector.shape_cast %33 : vector<1x4x256xf32> to vector<4x256xf32>
    %35 = arith.mulf %32, %34 : vector<4x256xf32>
    %36 = arith.addf %31, %35 : vector<4x256xf32>
    %c240_i32 = arith.constant 240 : i32
    %37 = tpu.dynamic_rotate %1 by %c240_i32 dim 1 : vector<4x256xf32>, i32 -> vector<4x256xf32>
    %c7 = arith.constant 7 : index
    %c0_17 = arith.constant 0 : index
    %c0_18 = arith.constant 0 : index
    %38 = vector.load %arg2[%c7, %c0_17, %c0_18] : memref<9x4x256xf32, #tpu.memory_space<vmem>>, vector<1x4x256xf32>
    %39 = vector.shape_cast %38 : vector<1x4x256xf32> to vector<4x256xf32>
    %40 = arith.mulf %37, %39 : vector<4x256xf32>
    %41 = arith.addf %36, %40 : vector<4x256xf32>
    %c239_i32 = arith.constant 239 : i32
    %42 = tpu.dynamic_rotate %1 by %c239_i32 dim 1 : vector<4x256xf32>, i32 -> vector<4x256xf32>
    %c8 = arith.constant 8 : index
    %c0_19 = arith.constant 0 : index
    %c0_20 = arith.constant 0 : index
    %43 = vector.load %arg2[%c8, %c0_19, %c0_20] : memref<9x4x256xf32, #tpu.memory_space<vmem>>, vector<1x4x256xf32>
    %44 = vector.shape_cast %43 : vector<1x4x256xf32> to vector<4x256xf32>
    %45 = arith.mulf %42, %44 : vector<4x256xf32>
    %46 = arith.addf %41, %45 : vector<4x256xf32>
    %c0_21 = arith.constant 0 : index
    %c0_22 = arith.constant 0 : index
    %47 = vector.load %arg3[%c0_21, %c0_22] : memref<8x4xf32, #tpu.memory_space<vmem>>, vector<8x4xf32>
    %cst_23 = arith.constant 0.000000e+00 : f32
    %48 = vector.broadcast %cst_23 : f32 to vector<8x256xf32>
    %49 = vector.extract_strided_slice %47 {offsets = [0, 0], sizes = [8, 1], strides = [1, 1]} : vector<8x4xf32> to vector<8x1xf32>
    %50 = vector.extract_strided_slice %46 {offsets = [0, 0], sizes = [1, 256], strides = [1, 1]} : vector<4x256xf32> to vector<1x256xf32>
    %51 = vector.broadcast %49 : vector<8x1xf32> to vector<8x256xf32>
    %52 = vector.broadcast %50 : vector<1x256xf32> to vector<8x256xf32>
    %53 = arith.mulf %51, %52 : vector<8x256xf32>
    %54 = arith.addf %48, %53 : vector<8x256xf32>
    %55 = vector.extract_strided_slice %47 {offsets = [0, 1], sizes = [8, 1], strides = [1, 1]} : vector<8x4xf32> to vector<8x1xf32>
    %56 = vector.extract_strided_slice %46 {offsets = [1, 0], sizes = [1, 256], strides = [1, 1]} : vector<4x256xf32> to vector<1x256xf32>
    %57 = vector.broadcast %55 : vector<8x1xf32> to vector<8x256xf32>
    %58 = vector.broadcast %56 : vector<1x256xf32> to vector<8x256xf32>
    %59 = arith.mulf %57, %58 : vector<8x256xf32>
    %60 = arith.addf %54, %59 : vector<8x256xf32>
    %61 = vector.extract_strided_slice %47 {offsets = [0, 2], sizes = [8, 1], strides = [1, 1]} : vector<8x4xf32> to vector<8x1xf32>
    %62 = vector.extract_strided_slice %46 {offsets = [2, 0], sizes = [1, 256], strides = [1, 1]} : vector<4x256xf32> to vector<1x256xf32>
    %63 = vector.broadcast %61 : vector<8x1xf32> to vector<8x256xf32>
    %64 = vector.broadcast %62 : vector<1x256xf32> to vector<8x256xf32>
    %65 = arith.mulf %63, %64 : vector<8x256xf32>
    %66 = arith.addf %60, %65 : vector<8x256xf32>
    %67 = vector.extract_strided_slice %47 {offsets = [0, 3], sizes = [8, 1], strides = [1, 1]} : vector<8x4xf32> to vector<8x1xf32>
    %68 = vector.extract_strided_slice %46 {offsets = [3, 0], sizes = [1, 256], strides = [1, 1]} : vector<4x256xf32> to vector<1x256xf32>
    %69 = vector.broadcast %67 : vector<8x1xf32> to vector<8x256xf32>
    %70 = vector.broadcast %68 : vector<1x256xf32> to vector<8x256xf32>
    %71 = arith.mulf %69, %70 : vector<8x256xf32>
    %72 = arith.addf %66, %71 : vector<8x256xf32>
    %c0_24 = arith.constant 0 : index
    %c0_25 = arith.constant 0 : index
    %c0_26 = arith.constant 0 : index
    %73 = vector.load %arg4[%c0_24, %c0_25, %c0_26] : memref<1x8x256xf32, #tpu.memory_space<vmem>>, vector<1x8x256xf32>
    %74 = vector.shape_cast %73 : vector<1x8x256xf32> to vector<8x256xf32>
    %75 = vector.shape_cast %72 : vector<8x256xf32> to vector<1x8x256xf32>
    tpu.vector_store %arg4[%c0_24, %c0_25, %c0_26], %75 {strides = array<i32>} : memref<1x8x256xf32, #tpu.memory_space<vmem>>, vector<1x8x256xf32>,
    return
  }
  func.func @transform_0(%arg0: i32) -> (i32, i32, i32) {
    %c0_i32 = arith.constant 0 : i32
    %c0_i32_0 = arith.constant 0 : i32
    %c0_i32_1 = arith.constant 0 : i32
    return %arg0, %c0_i32, %c0_i32_0 : i32, i32, i32
  }
  func.func @transform_1(%arg0: i32) -> (i32, i32, i32) {
    %c0_i32 = arith.constant 0 : i32
    %c0_i32_0 = arith.constant 0 : i32
    %c0_i32_1 = arith.constant 0 : i32
    %c0_i32_2 = arith.constant 0 : i32
    return %c0_i32, %c0_i32_0, %c0_i32_1 : i32, i32, i32
  }
  func.func @transform_2(%arg0: i32) -> (i32, i32) {
    %c0_i32 = arith.constant 0 : i32
    %c0_i32_0 = arith.constant 0 : i32
    %c0_i32_1 = arith.constant 0 : i32
    return %c0_i32, %c0_i32_0 : i32, i32
  }
  func.func @transform_3(%arg0: i32) -> (i32, i32, i32) {
    %c0_i32 = arith.constant 0 : i32
    %c0_i32_0 = arith.constant 0 : i32
    %c0_i32_1 = arith.constant 0 : i32
    return %arg0, %c0_i32, %c0_i32_0 : i32, i32, i32
  }
}

</mosaic_0001>

<llo_original>
// kernel: tpu_custom_call.1
$region0: #{tpu_custom_call.1}
  #allocation0 [shape = 'u32[]', space=smem, size = 0x4, offset = 0x4, fixed_abs, tag = 'smem constant byte address 0x4 - core index']
  #allocation1 [shape = 'u32[144,128]{1,0:T(1,128)}', space=vmem, size = 0x12000, scoped, tag = 'internal scratch']
  %s0 = inlined_call_operand.hbm [shape: f32[2,4,256], index: 0, kind: input, shape index: {}]
  %s1 = inlined_call_operand.hbm [shape: f32[9,4,256], index: 1, kind: input, shape index: {}]
  %s2 = inlined_call_operand.vmem [shape: f32[8,4], index: 2, kind: input, shape index: {}]
  %s3 = inlined_call_operand.hbm [shape: f32[2,8,256], index: 3, kind: output, shape index: {}]
  %s4 = sld [smem:[#allocation0]]
  $region53: #{tpu_custom_call.1} parent=0
    _
  %s6 = ssub.s32 1, %s4
  %s7 = scalar_select 0, %s6, %s4
  $region1: #{tpu_custom_call.1} parent=0
    #allocation2 [shape = 'u8[8192]{0}', space=vmem, size = 0x2000, scoped, tag = 'input window, operand 0']
    #allocation3 [shape = 's32[2]{0}', space=sflag, size = 0x8, scoped, tag = 'scoped memory for tpu_custom_call.1']
    #allocation4 [shape = 's32[2]{0}', space=sflag, size = 0x8, scoped, tag = 'scoped memory for tpu_custom_call.1']
    #allocation5 [shape = 'u8[36864]{0}', space=vmem, size = 0x9000, scoped, tag = 'input window, operand 1, single buffered']
    #allocation6 [shape = 's32[1]{0}', space=sflag, size = 0x4, scoped, tag = 'scoped memory for tpu_custom_call.1']
    #allocation7 [shape = 'u8[16384]{0}', space=vmem, size = 0x4000, scoped, tag = 'output window, operand 0']
    %8 = vsyncpa [#allocation3], 0
    %s9 = scalar_lea.sflag [#allocation3], 1
    %10 = vsyncpa %s9, 0
    %11 = vsyncpa [#allocation6], 0
    %12 = vsyncpa [#allocation4], 0
    %s13 = scalar_lea.sflag [#allocation4], 1
    %14 = vsyncpa %s13, 0
    loop: start=0, step=1, limit=4
    $region2: #{tpu_custom_call.1} parent=1 // loop_pre_header
      _
    $region3: #{tpu_custom_call.1} parent=1 // loop_header
      %s16 = sphi 0, %s20
      %p17 = scmp.ge.s32.totalorder %s16, 4
      %s26 = sphi 0, %s28
      %s29 = sphi 0, %s26
      %s30 = sphi 0, %s29
      %s46 = sphi 0, %s30
      %s50 = sphi 0, %s50
      %s52 = sphi 0, %s50
      %s53 = sphi 0, %s52
      %s67 = sphi 0, %s53
      %s71 = sphi 0, %s71
      %s73 = sphi 0, %s71
      %s74 = sphi 0, %s73
      %s88 = sphi 0, %s74
      %s94 = sphi 0, %s96
      %s97 = sphi 0, %s94
      %s98 = sphi 0, %s97
      %s114 = sphi 0, %s98
    $region4: #{tpu_custom_call.1} parent=1 // loop_header_branch
      %19 = sbr.rel (%p17) target = $region8
    $region5: #{tpu_custom_call.1} parent=1 // loop_body
      %s21 = ssub.s32 %s16, 1
      %s22 = ssub.s32 %s16, 2
      %s23 = sadd.s32 %s16, 1
      %s24 = ssub.s32 %s16, %s23
      %p25 = scmp.eq.s32.totalorder %s24, 0
      %s27 = sadd.s32 %s26, 1
      %s28 = scalar_select %p25, %s26, %s27
      %p31 = pneg %p25
      %p32 = scmp.eq.s32.totalorder %s16, 1
      %p33 = por %p31, %p32
      %p34 = scmp.ne.s32.totalorder %s26, %s29
      %p35 = scmp.eq.s32.totalorder %s16, 0
      %p36 = por %p34, %p35
      %p37 = scmp.ne.s32.totalorder %s26, %s29
      %p38 = scmp.eq.s32.totalorder %s21, 1
      %p39 = por %p37, %p38
      %p40 = scmp.ne.s32.totalorder %s29, %s30
      %p41 = scmp.eq.s32.totalorder %s21, 0
      %p42 = por %p40, %p41
      %p43 = scmp.ne.s32.totalorder %s29, %s30
      %p44 = scmp.eq.s32.totalorder %s22, 1
      %p45 = por %p43, %p44
      %p47 = scmp.ne.s32.totalorder %s30, %s46
      %p48 = scmp.eq.s32.totalorder %s22, 0
      %p49 = por %p47, %p48
      %s51 = sadd.s32 %s50, 1
      %p54 = scmp.eq.s32.totalorder %s16, 1
      %p55 = scmp.ne.s32.totalorder %s50, %s52
      %p56 = scmp.eq.s32.totalorder %s16, 0
      %p57 = por %p55, %p56
      %p58 = scmp.ne.s32.totalorder %s50, %s52
      %p59 = scmp.eq.s32.totalorder %s21, 1
      %p60 = por %p58, %p59
      %p61 = scmp.ne.s32.totalorder %s52, %s53
      %p62 = scmp.eq.s32.totalorder %s21, 0
      %p63 = por %p61, %p62
      %p64 = scmp.ne.s32.totalorder %s52, %s53
      %p65 = scmp.eq.s32.totalorder %s22, 1
      %p66 = por %p64, %p65
      %p68 = scmp.ne.s32.totalorder %s53, %s67
      %p69 = scmp.eq.s32.totalorder %s22, 0
      %p70 = por %p68, %p69
      %s72 = sadd.s32 %s71, 1
      %p75 = scmp.eq.s32.totalorder %s16, 1
      %p76 = scmp.ne.s32.totalorder %s71, %s73
      %p77 = scmp.eq.s32.totalorder %s16, 0
      %p78 = por %p76, %p77
      %p79 = scmp.ne.s32.totalorder %s71, %s73
      %p80 = scmp.eq.s32.totalorder %s21, 1
      %p81 = por %p79, %p80
      %p82 = scmp.ne.s32.totalorder %s73, %s74
      %p83 = scmp.eq.s32.totalorder %s21, 0
      %p84 = por %p82, %p83
      %p85 = scmp.ne.s32.totalorder %s73, %s74
      %p86 = scmp.eq.s32.totalorder %s22, 1
      %p87 = por %p85, %p86
      %p89 = scmp.ne.s32.totalorder %s74, %s88
      %p90 = scmp.eq.s32.totalorder %s22, 0
      %p91 = por %p89, %p90
      %s92 = ssub.s32 %s16, %s23
      %p93 = scmp.eq.s32.totalorder %s92, 0
      %s95 = sadd.s32 %s94, 1
      %s96 = scalar_select %p93, %s94, %s95
      %p99 = pneg %p93
      %p100 = scmp.eq.s32.totalorder %s16, 1
      %p101 = por %p99, %p100
      %p102 = scmp.ne.s32.totalorder %s94, %s97
      %p103 = scmp.eq.s32.totalorder %s16, 0
      %p104 = por %p102, %p103
      %p105 = scmp.ne.s32.totalorder %s94, %s97
      %p106 = scmp.eq.s32.totalorder %s21, 1
      %p107 = por %p105, %p106
      %p108 = scmp.ne.s32.totalorder %s97, %s98
      %p109 = scmp.eq.s32.totalorder %s21, 0
      %p110 = por %p108, %p109
      %p111 = scmp.ne.s32.totalorder %s97, %s98
      %p112 = scmp.eq.s32.totalorder %s22, 1
      %p113 = por %p111, %p112
      %p115 = scmp.ne.s32.totalorder %s98, %s114
      %p116 = scmp.eq.s32.totalorder %s22, 0
      %p117 = por %p115, %p116
      %p118 = scmp.le.s32.totalorder 1, %s16
      %p119 = scmp.lt.s32.totalorder %s16, 3
      %p120 = pnand %p118, %p119
      %p121 = pneg %p120
      // Predicated region
      $region9: #{tpu_custom_call.1} parent=5 // pred_check
        _
      $region10: #{tpu_custom_call.1} parent=5 // pred_check_branch
        %123 = sbr.rel (%p120) target = $region12
      $region11: #{tpu_custom_call.1} parent=5 // pred_region
        %s124 = ssub.s32 %s16, 1
        // Predicated region
        $region13: #{tpu_custom_call.1} parent=11 // pred_check
          %p125 = pneg %p63
        $region14: #{tpu_custom_call.1} parent=11 // pred_check_branch
          %127 = sbr.rel (%p125) target = $region16
        $region15: #{tpu_custom_call.1} parent=11 // pred_region
          %s129 = ssub.s32 1152, 1152
          %130 = vsyncadd [#allocation6], %s129
          %s131 = sshll.u32 [#allocation5], 4
          %s132 = int_to_ptr.vmem [resolvable:$true] %s131
          %137 = dma.hbm_to_vmem [thread:$0]  %s1, 1152, %s132, [#allocation6], 128, 128, 8
        $region16: #{tpu_custom_call.1} parent=11 // pred_fallthru
          _
        // Predicated region
        $region17: #{tpu_custom_call.1} parent=11 // pred_check
          %p138 = pneg %p84
        $region18: #{tpu_custom_call.1} parent=11 // pred_check_branch
          %140 = sbr.rel (%p138) target = $region20
        $region19: #{tpu_custom_call.1} parent=11 // pred_region
          _
        $region20: #{tpu_custom_call.1} parent=11 // pred_fallthru
          _
      $region12: #{tpu_custom_call.1} parent=5 // pred_fallthru
        _
      %p141 = scmp.lt.s32.totalorder %s16, 2
      // Predicated region
      $region21: #{tpu_custom_call.1} parent=5 // pred_check
        %p142 = pneg %p141
      $region22: #{tpu_custom_call.1} parent=5 // pred_check_branch
        %144 = sbr.rel (%p142) target = $region24
      $region23: #{tpu_custom_call.1} parent=5 // pred_region
        // Predicated region
        $region25: #{tpu_custom_call.1} parent=23 // pred_check
          %p145 = pneg %p36
        $region26: #{tpu_custom_call.1} parent=23 // pred_check_branch
          %147 = sbr.rel (%p145) target = $region28
        $region27: #{tpu_custom_call.1} parent=23 // pred_region
          %s148 = sand.u32 %s26, 1
          %s149 = scalar_lea.sflag [#allocation3], %s148
          %s150 = sand.u32 %s26, 1
          %s151 = smul.addr %s150, 8
          %s152 = scalar_lea.vmem [#allocation2], %s151
          %s154 = ssub.s32 128, 128
          %155 = vsyncadd %s149, %s154
          %s156 = smul.addr %s16, 2
          %s157 = smul.addr %s156, 64
          %s158 = scalar_lea.hbm %s0, %s157
          %s160 = sshll.u32 %s152, 4
          %s161 = int_to_ptr.vmem [resolvable:$true] %s160
          %163 = dma.hbm_to_vmem [thread:$0]  %s158, 128, %s161, %s149
        $region28: #{tpu_custom_call.1} parent=23 // pred_fallthru
          _
      $region24: #{tpu_custom_call.1} parent=5 // pred_fallthru
        _
      %p164 = scmp.le.s32.totalorder 1, %s16
      %p165 = scmp.lt.s32.totalorder %s16, 3
      %p166 = pnand %p164, %p165
      %p167 = pneg %p166
      // Predicated region
      $region29: #{tpu_custom_call.1} parent=5 // pred_check
        _
      $region30: #{tpu_custom_call.1} parent=5 // pred_check_branch
        %169 = sbr.rel (%p166) target = $region32
      $region31: #{tpu_custom_call.1} parent=5 // pred_region
        %s170 = ssub.s32 %s16, 1
        %s171 = sand.u32 %s29, 1
        %s172 = scalar_lea.sflag [#allocation3], %s171
        %s173 = sand.u32 %s29, 1
        %s174 = smul.addr %s173, 8
        %s175 = scalar_lea.vmem [#allocation2], %s174
        // Predicated region
        $region33: #{tpu_custom_call.1} parent=31 // pred_check
          %p176 = pneg %p42
        $region34: #{tpu_custom_call.1} parent=31 // pred_check_branch
          %178 = sbr.rel (%p176) target = $region36
        $region35: #{tpu_custom_call.1} parent=31 // pred_region
          %179 = dma.done %s172, 128
        $region36: #{tpu_custom_call.1} parent=31 // pred_fallthru
          _
        // Predicated region
        $region37: #{tpu_custom_call.1} parent=31 // pred_check
          %p180 = pneg %p63
        $region38: #{tpu_custom_call.1} parent=31 // pred_check_branch
          %182 = sbr.rel (%p180) target = $region40
        $region39: #{tpu_custom_call.1} parent=31 // pred_region
          %183 = dma.done [#allocation6], 1152
        $region40: #{tpu_custom_call.1} parent=31 // pred_fallthru
          _
        %s184 = sand.u32 %s29, 1
        %s185 = scalar_lea.sflag [#allocation3], %s184
        %s186 = sand.u32 %s29, 1
        %s187 = smul.addr %s186, 8
        %s188 = scalar_lea.vmem [#allocation2], %s187
        %p189 = pneg %p42
        %p190 = pneg %p39
        %p191 = pneg %p63
        %p192 = pneg %p60
        %p193 = pneg %p84
        %p194 = pneg %p81
        %p195 = pneg %p110
        %p196 = pneg %p107
        %s197 = sand.u32 %s97, 1
        %s198 = scalar_lea.sflag [#allocation4], %s197
        %s199 = sand.u32 %s97, 1
        %s200 = smul.addr %s199, 16
        %s201 = scalar_lea.vmem [#allocation7], %s200
        %v202 = vld [vmem:[%s175] sm:$0xff]
        %v204 = vcombine.high %v202, %v202
        %206 = vrot.lane.b32.xlu0 %v202, 17
        %v207 = vpop.permute.xlu0 %206
        %208 = vrot.lane.b32.xlu0 %v204, 17
        %v209 = vpop.permute.xlu0 %208
        %v210 = vlaneseq
        %v211 = vand.u32 %v210, 127
        %vm212 = vcmp.lt.s32.totalorder %v211, 17
        %v213 = vsel %vm212, %v207, %v209
        %v214 = vsel %vm212, %v209, %v207
        %v215 = vld [vmem:[#allocation5] sm:$0xff]
        %v217 = vcombine.high %v215, %v215
        %v219 = vmul.f32 %v214, %v215
        %v220 = vmul.f32 %v213, %v217
        %v221 = vadd.f32 %v219, 0.0
        %v222 = vadd.f32 %v220, 0.0
        %223 = vrot.lane.b32.xlu0 %v202, 16
        %v224 = vpop.permute.xlu0 %223
        %225 = vrot.lane.b32.xlu0 %v204, 16
        %v226 = vpop.permute.xlu0 %225
        %vm227 = vcmp.lt.s32.totalorder %v211, 16
        %v228 = vsel %vm227, %v224, %v226
        %v229 = vsel %vm227, %v226, %v224
        %s230 = scalar_lea.vmem [#allocation5], 8
        %v231 = vld [vmem:[%s230] sm:$0xff]
        %v233 = vcombine.high %v231, %v231
        %v235 = vmul.f32 %v229, %v231
        %v236 = vmul.f32 %v228, %v233
        %v237 = vadd.f32 %v221, %v235
        %v238 = vadd.f32 %v222, %v236
        %239 = vrot.lane.b32.xlu0 %v202, 15
        %v240 = vpop.permute.xlu0 %239
        %241 = vrot.lane.b32.xlu0 %v204, 15
        %v242 = vpop.permute.xlu0 %241
        %vm243 = vcmp.lt.s32.totalorder %v211, 15
        %v244 = vsel %vm243, %v240, %v242
        %v245 = vsel %vm243, %v242, %v240
        %s246 = scalar_lea.vmem [#allocation5], 16
        %v247 = vld [vmem:[%s246] sm:$0xff]
        %v249 = vcombine.high %v247, %v247
        %v251 = vmul.f32 %v245, %v247
        %v252 = vmul.f32 %v244, %v249
        %v253 = vadd.f32 %v237, %v251
        %v254 = vadd.f32 %v238, %v252
        %255 = vrot.lane.b32.xlu0 %v202, 1
        %v256 = vpop.permute.xlu0 %255
        %257 = vrot.lane.b32.xlu0 %v204, 1
        %v258 = vpop.permute.xlu0 %257
        %vm259 = vcmp.lt.s32.totalorder %v211, 1
        %v260 = vsel %vm259, %v256, %v258
        %v261 = vsel %vm259, %v258, %v256
        %s262 = scalar_lea.vmem [#allocation5], 24
        %v263 = vld [vmem:[%s262] sm:$0xff]
        %v265 = vcombine.high %v263, %v263
        %v267 = vmul.f32 %v261, %v263
        %v268 = vmul.f32 %v260, %v265
        %v269 = vadd.f32 %v253, %v267
        %v270 = vadd.f32 %v254, %v268
        %s271 = scalar_lea.vmem [#allocation5], 32
        %v272 = vld [vmem:[%s271] sm:$0xff]
        %v273 = vmul.f32 %v202, %v272
        %v275 = vcombine.high %v273, %v273
        %v277 = vadd.f32 %v269, %v273
        %v278 = vadd.f32 %v270, %v275
        %279 = vrot.lane.b32.xlu0 %v202, 127
        %v280 = vpop.permute.xlu0 %279
        %281 = vrot.lane.b32.xlu0 %v204, 127
        %v282 = vpop.permute.xlu0 %281
        %vm283 = vcmp.lt.s32.totalorder %v211, 127
        %v284 = vsel %vm283, %v280, %v282
        %v285 = vsel %vm283, %v282, %v280
        %s286 = scalar_lea.vmem [#allocation5], 40
        %v287 = vld [vmem:[%s286] sm:$0xff]
        %v289 = vcombine.high %v287, %v287
        %v291 = vmul.f32 %v284, %v287
        %v292 = vmul.f32 %v285, %v289
        %v293 = vadd.f32 %v277, %v291
        %v294 = vadd.f32 %v278, %v292
        %295 = vrot.lane.b32.xlu0 %v202, 113
        %v296 = vpop.permute.xlu0 %295
        %297 = vrot.lane.b32.xlu0 %v204, 113
        %v298 = vpop.permute.xlu0 %297
        %vm299 = vcmp.lt.s32.totalorder %v211, 113
        %v300 = vsel %vm299, %v296, %v298
        %v301 = vsel %vm299, %v298, %v296
        %s302 = scalar_lea.vmem [#allocation5], 48
        %v303 = vld [vmem:[%s302] sm:$0xff]
        %v305 = vcombine.high %v303, %v303
        %v307 = vmul.f32 %v300, %v303
        %v308 = vmul.f32 %v301, %v305
        %v309 = vadd.f32 %v293, %v307
        %v310 = vadd.f32 %v294, %v308
        %311 = vrot.lane.b32.xlu0 %v202, 112
        %v312 = vpop.permute.xlu0 %311
        %313 = vrot.lane.b32.xlu0 %v204, 112
        %v314 = vpop.permute.xlu0 %313
        %vm315 = vcmp.lt.s32.totalorder %v211, 112
        %v316 = vsel %vm315, %v312, %v314
        %v317 = vsel %vm315, %v314, %v312
        %s318 = scalar_lea.vmem [#allocation5], 56
        %v319 = vld [vmem:[%s318] sm:$0xff]
        %v321 = vcombine.high %v319, %v319
        %v323 = vmul.f32 %v316, %v319
        %v324 = vmul.f32 %v317, %v321
        %v325 = vadd.f32 %v309, %v323
        %v326 = vadd.f32 %v310, %v324
        %327 = vrot.lane.b32.xlu0 %v202, 111
        %v328 = vpop.permute.xlu0 %327
        %329 = vrot.lane.b32.xlu0 %v204, 111
        %v330 = vpop.permute.xlu0 %329
        %vm331 = vcmp.lt.s32.totalorder %v211, 111
        %v332 = vsel %vm331, %v328, %v330
        %v333 = vsel %vm331, %v330, %v328
        %s334 = scalar_lea.vmem [#allocation5], 64
        %v335 = vld [vmem:[%s334] sm:$0xff]
        %v337 = vcombine.high %v335, %v335
        %v339 = vmul.f32 %v332, %v335
        %v340 = vmul.f32 %v333, %v337
        %v341 = vadd.f32 %v325, %v339
        %v342 = vadd.f32 %v326, %v340
        %v343 = vld [vmem:[%s2] sm:$0xff]
        %345 = vset.pattern.permute.xlu0 0
        %346 = vperm.xlu0 %345, %v343
        %v347 = vpop.permute.xlu0 %346
        %v349 = vlaneseq
        %v350 = vshrl.u32 %v349, 7
        %v351 = vsub.s32 0, %v350
        %v352 = vrot.slane %v341, %v351
        %v353 = vlaneseq
        %v354 = vshrl.u32 %v353, 7
        %v355 = vsub.s32 0, %v354
        %v356 = vrot.slane %v342, %v355
        %v357 = vmul.f32 %v347, %v352
        %v358 = vmul.f32 %v347, %v356
        %v359 = vadd.f32 %v357, 0.0
        %v360 = vadd.f32 %v358, 0.0
        %361 = vset.pattern.permute.xlu0 1
        %362 = vperm.xlu0 %361, %v343
        %v363 = vpop.permute.xlu0 %362
        %v365 = vlaneseq
        %v366 = vshrl.u32 %v365, 7
        %v367 = vsub.s32 1, %v366
        %v368 = vrot.slane %v341, %v367
        %v369 = vlaneseq
        %v370 = vshrl.u32 %v369, 7
        %v371 = vsub.s32 1, %v370
        %v372 = vrot.slane %v342, %v371
        %v373 = vmul.f32 %v363, %v368
        %v374 = vmul.f32 %v363, %v372
        %v375 = vadd.f32 %v359, %v373
        %v376 = vadd.f32 %v360, %v374
        %377 = vset.pattern.permute.xlu0 2
        %378 = vperm.xlu0 %377, %v343
        %v379 = vpop.permute.xlu0 %378
        %v381 = vlaneseq
        %v382 = vshrl.u32 %v381, 7
        %v383 = vsub.s32 2, %v382
        %v384 = vrot.slane %v341, %v383
        %v385 = vlaneseq
        %v386 = vshrl.u32 %v385, 7
        %v387 = vsub.s32 2, %v386
        %v388 = vrot.slane %v342, %v387
        %v389 = vmul.f32 %v379, %v384
        %v390 = vmul.f32 %v379, %v388
        %v391 = vadd.f32 %v375, %v389
        %v392 = vadd.f32 %v376, %v390
        %393 = vset.pattern.permute.xlu0 3
        %394 = vperm.xlu0 %393, %v343
        %v395 = vpop.permute.xlu0 %394
        %v397 = vlaneseq
        %v398 = vshrl.u32 %v397, 7
        %v399 = vsub.s32 3, %v398
        %v400 = vrot.slane %v341, %v399
        %v401 = vlaneseq
        %v402 = vshrl.u32 %v401, 7
        %v403 = vsub.s32 3, %v402
        %v404 = vrot.slane %v342, %v403
        %v405 = vmul.f32 %v395, %v400
        %v406 = vmul.f32 %v395, %v404
        %v407 = vadd.f32 %v391, %v405
        %v408 = vadd.f32 %v392, %v406
        %409 = vst [vmem:[%s201] sm:$0xff] %v407
        %410 = vst [vmem:[%s201 + $0x8] sm:$0xff] %v408
        %s411 = sand.u32 %s97, 1
        %s412 = scalar_lea.sflag [#allocation4], %s411
        %s413 = sand.u32 %s97, 1
        %s414 = smul.addr %s413, 16
        %s415 = scalar_lea.vmem [#allocation7], %s414
        // Predicated region
        $region41: #{tpu_custom_call.1} parent=31 // pred_check
          %p416 = pneg %p107
        $region42: #{tpu_custom_call.1} parent=31 // pred_check_branch
          %418 = sbr.rel (%p416) target = $region44
        $region43: #{tpu_custom_call.1} parent=31 // pred_region
          %s420 = ssub.s32 256, 256
          %421 = vsyncadd %s412, %s420
          %s422 = smul.addr %s21, 2
          %s423 = smul.addr %s422, 128
          %s424 = scalar_lea.hbm %s3, %s423
          %s426 = sshll.u32 %s415, 4
          %s427 = int_to_ptr.vmem [resolvable:$true] %s426
          %429 = dma.vmem_to_hbm [thread:$0]  %s427, 256, %s424, %s412
        $region44: #{tpu_custom_call.1} parent=31 // pred_fallthru
          _
      $region32: #{tpu_custom_call.1} parent=5 // pred_fallthru
        _
      %p430 = scmp.le.s32.totalorder 2, %s16
      // Predicated region
      $region45: #{tpu_custom_call.1} parent=5 // pred_check
        %p431 = pneg %p430
      $region46: #{tpu_custom_call.1} parent=5 // pred_check_branch
        %433 = sbr.rel (%p431) target = $region48
      $region47: #{tpu_custom_call.1} parent=5 // pred_region
        %s434 = ssub.s32 %s16, 2
        // Predicated region
        $region49: #{tpu_custom_call.1} parent=47 // pred_check
          %p435 = pneg %p113
        $region50: #{tpu_custom_call.1} parent=47 // pred_check_branch
          %437 = sbr.rel (%p435) target = $region52
        $region51: #{tpu_custom_call.1} parent=47 // pred_region
          %s438 = sand.u32 %s98, 1
          %s439 = scalar_lea.sflag [#allocation4], %s438
          %s440 = sand.u32 %s98, 1
          %s441 = smul.addr %s440, 16
          %s442 = scalar_lea.vmem [#allocation7], %s441
          %443 = dma.done %s439, 256
        $region52: #{tpu_custom_call.1} parent=47 // pred_fallthru
          _
      $region48: #{tpu_custom_call.1} parent=5 // pred_fallthru
        _
    $region6: #{tpu_custom_call.1} parent=1 // loop_footer
      %s20 = sadd.s32 1, %s16
    $region7: #{tpu_custom_call.1} parent=1 // loop_footer_branch
      %15 = sbr.rel target = $region3
    $region8: #{tpu_custom_call.1} parent=1 // loop_exit
      _
    %444 = vsyncpa [#allocation3], 1
    %s445 = scalar_lea.sflag [#allocation3], 1
    %446 = vsyncpa %s445, 1
    %447 = vsyncpa [#allocation6], 1
    %448 = vsyncpa [#allocation4], 1
    %s449 = scalar_lea.sflag [#allocation4], 1
    %450 = vsyncpa %s449, 1

</llo_original>
